<compile_context>
chip_gen: v5e
topology: v5e:2x2
jax: 0.10.0
libtpu: 0.0.40
codegen_flags: <defaults>
</compile_context>

<pallas_src>
import functools

import jax
import jax.numpy as jnp
from jax.experimental import pallas as pl
from jax.experimental.pallas import tpu as pltpu


def _round_up(x, m):
    return ((x + m - 1) // m) * m


def _vmem_info():
    """Returns (vmem budget for this pallas_call, physical VMEM bytes), per generation."""
    phys = 64 * 1024 * 1024
    try:
        phys = int(pltpu.get_tpu_info().vmem_capacity_bytes)
    except Exception:
        pass
    if phys <= 64 * 1024 * 1024:          # v7x-class: 64 MiB per TensorCore -> keep headroom
        return 48 * 1024 * 1024, phys
    return 100 * 1024 * 1024, phys         # v5e / v6e: 128 MiB physical


# ----------------------------- fused kernel (small graphs) -----------------------------

def gcn_fused_kernel(adj_ref, xw1_ref, b1_ref, w2_ref, b2_ref, wfc_ref, bfc_ref, out_ref):
    cdt = adj_ref.dtype
    # Layer 1 (W1 already folded into XW1 in the wrapper): H1 = relu(A @ XW1 + b1).
    h1 = jnp.maximum(
        jnp.dot(adj_ref[...], xw1_ref[...], preferred_element_type=jnp.float32) + b1_ref[...],
        0.0)
    # Fold W2: A @ (H1 @ W2) is cheaper than (A @ H1) @ W2 since h2_feats < h1_feats.
    h1w2 = jnp.dot(h1.astype(w2_ref.dtype), w2_ref[...], preferred_element_type=jnp.float32)
    h2 = jnp.dot(adj_ref[...], h1w2.astype(cdt), preferred_element_type=jnp.float32) + b2_ref[...]
    logits = (jnp.dot(h2.astype(wfc_ref.dtype), wfc_ref[...], preferred_element_type=jnp.float32)
              + bfc_ref[...])
    m = jnp.max(logits, axis=-1, keepdims=True)
    z = logits - m
    out_ref[...] = z - jnp.log(jnp.sum(jnp.exp(z), axis=-1, keepdims=True))


# --------------------------- tiled kernels (large graphs) ------------------------------

def gcn_phase1_kernel(adj_ref, xw1_ref, b1_ref, w2_ref, h1w2_ref, acc_ref, *, tile_k, resident):
    # Accumulate A[i, k] @ XW1[k] over the adjacency-column (reduction) grid axis, then apply
    # +b1 + ReLU + W2 in the epilogue. Output is H1W2 (width h2_feats).
    k = pl.program_id(1)

    @pl.when(k == 0)
    def _():
        acc_ref[...] = jnp.zeros_like(acc_ref)

    if resident:
        # XW1 is fully VMEM-resident (constant-index BlockSpec, DMA'd once); slice per K step.
        ks = pl.multiple_of(k * tile_k, tile_k)
        xk = xw1_ref[pl.ds(ks, tile_k), :]
    else:
        xk = xw1_ref[...]
    acc_ref[...] += jnp.dot(adj_ref[...], xk, preferred_element_type=jnp.float32)

    @pl.when(k == pl.num_programs(1) - 1)
    def _():
        h1 = jnp.maximum(acc_ref[...] + b1_ref[...], 0.0)
        h1w2_ref[...] = jnp.dot(h1.astype(w2_ref.dtype), w2_ref[...],
                                preferred_element_type=jnp.float32).astype(h1w2_ref.dtype)


def gcn_phase2_kernel(adj_ref, h_ref, b2_ref, wfc_ref, bfc_ref, out_ref, acc_ref,
                      *, tile_k, resident):
    # Accumulate A[i, k] @ H1W2[k]; epilogue does +b2, FC and log_softmax (all f32).
    k = pl.program_id(1)

    @pl.when(k == 0)
    def _():
        acc_ref[...] = jnp.zeros_like(acc_ref)

    if resident:
        ks = pl.multiple_of(k * tile_k, tile_k)
        hk = h_ref[pl.ds(ks, tile_k), :]
    else:
        hk = h_ref[...]
    acc_ref[...] += jnp.dot(adj_ref[...], hk, preferred_element_type=jnp.float32)

    @pl.when(k == pl.num_programs(1) - 1)
    def _():
        h2 = acc_ref[...] + b2_ref[...]
        logits = (jnp.dot(h2.astype(wfc_ref.dtype), wfc_ref[...],
                          preferred_element_type=jnp.float32) + bfc_ref[...])
        m = jnp.max(logits, axis=-1, keepdims=True)
        z = logits - m
        out_ref[...] = z - jnp.log(jnp.sum(jnp.exp(z), axis=-1, keepdims=True))


# ------------------------------------- wrapper ------------------------------------------

def gcn_forward(adj, x, w1, b1, w2, b2, wfc, bfc, *, mode="auto", tile_n=256, tile_k=512,
                compute_dtype=None, vmem_limit_bytes=None):
    N, _fin = x.shape
    h1f = w1.shape[1]
    h2f = w2.shape[1]
    ncls = wfc.shape[1]

    budget, phys_vmem = _vmem_info()
    if vmem_limit_bytes is None:
        vmem_limit_bytes = budget

    if compute_dtype is None:
        # v5e is the most HBM-starved generation and has no bf16 VPU/EUP anyway (elementwise
        # math below stays f32): default to bf16 MXU inputs there, f32 everywhere else.
        kind = ""
        try:
            kind = jax.devices()[0].device_kind.lower()
        except Exception:
            pass
        compute_dtype = jnp.bfloat16 if ("v5" in kind and ("lite" in kind or "v5e" in kind)) \
            else jnp.float32
    cdt = jnp.dtype(compute_dtype)
    itemsize = cdt.itemsize

    # Lane-dense class padding: pad the class dim to a multiple of 128 so the output store is
    # unmasked. Padded logits get a -1e30 bias (applied via bfc only; Wfc columns are zero)
    # -> exp underflows to exactly 0, so log_softmax over the real classes is unchanged.
    C = _round_up(ncls, 128)
    if C != ncls:
        wfc_p = jnp.pad(wfc, ((0, 0), (0, C - ncls)))
        bfc_p = jnp.pad(bfc, ((0, 0), (0, C - ncls)), constant_values=-1e30)
    else:
        wfc_p, bfc_p = wfc, bfc

    # bf16 MXU inputs (when requested); biases / elementwise math stay f32.
    adj_c = adj.astype(cdt)
    w2_c = w2.astype(cdt)
    wfc_c = wfc_p.astype(cdt)
    b1_f = b1.astype(jnp.float32)
    b2_f = b2.astype(jnp.float32)
    bfc_f = bfc_p.astype(jnp.float32)

    # Hoist X @ W1 (tiny [N,fin]@[fin,h1f] matmul, done once in XLA): A @ (X@W1) == (A@X) @ W1,
    # so the phase-1 epilogue loses a matmul and the in-kernel accumulator is lane-dense.
    xw1 = jnp.dot(x.astype(cdt), w1.astype(cdt), preferred_element_type=jnp.float32).astype(cdt)

    if mode == "auto":
        # Fused-path VMEM footprint: double-buffered inputs + output block + f32 intermediates.
        fused_bytes = (
            2 * (N * N + N * h1f) * itemsize                                  # A + XW1
            + 2 * ((h1f * h2f + h2f * C) * itemsize + (h1f + h2f + C) * 4)    # weights/biases
            + 2 * N * C * 4                                                    # (N, C) f32 out
            + 4 * N * (2 * h1f + 2 * h2f + C)                                  # f32 intermediates
        )
        fits = fused_bytes <= vmem_limit_bytes
        if phys_vmem <= 64 * 1024 * 1024:
            # v7x: grid=(1,) runs on one of the two TensorCores with no DMA/compute overlap;
            # only take it for trivially small graphs.
            mode = "fused" if (fits and N <= 1024) else "tiled"
        else:
            mode = "fused" if fits else "tiled"

    if mode == "fused":
        out_p = pl.pallas_call(
            gcn_fused_kernel,
            out_shape=jax.ShapeDtypeStruct((N, C), jnp.float32),
            grid_spec=pltpu.PrefetchScalarGridSpec(
                num_scalar_prefetch=0,
                grid=(1,),
                in_specs=[
                    pl.BlockSpec((N, N), lambda i: (0, 0)),      # A_hat
                    pl.BlockSpec((N, h1f), lambda i: (0, 0)),    # XW1 (= X @ W1)
                    pl.BlockSpec((1, h1f), lambda i: (0, 0)),    # b1
                    pl.BlockSpec((h1f, h2f), lambda i: (0, 0)),  # W2
                    pl.BlockSpec((1, h2f), lambda i: (0, 0)),    # b2
                    pl.BlockSpec((h2f, C), lambda i: (0, 0)),    # Wfc (class-padded)
                    pl.BlockSpec((1, C), lambda i: (0, 0)),      # bfc (class-padded)
                ],
                out_specs=pl.BlockSpec((N, C), lambda i: (0, 0)),
            ),
            compiler_params=pltpu.CompilerParams(
                dimension_semantics=("arbitrary",),
                vmem_limit_bytes=vmem_limit_bytes,
            ),
        )(adj_c, xw1, b1_f, w2_c, b2_f, wfc_c, bfc_f)
        return out_p[:, :ncls]

    # ------------------------------- tiled path -------------------------------
    assert tile_n % 8 == 0 and tile_k % 128 == 0, \
        "tile_n must be a multiple of 8 and tile_k a multiple of 128"

    # Pad the node count so the tiles divide it (ragged N handled by zero-padding A / XW1;
    # zero adjacency columns contribute nothing, padded output rows are sliced off).
    Np = _round_up(N, 128)
    tile_k = min(tile_k, Np)
    while Np % tile_k:
        tile_k -= 128
    tile_n = min(tile_n, Np)
    while Np % tile_n:
        tile_n -= 8

    if Np != N:
        adj_c = jnp.pad(adj_c, ((0, Np - N), (0, Np - N)))
        xw1 = jnp.pad(xw1, ((0, Np - N), (0, 0)))

    cparams = pltpu.CompilerParams(
        dimension_semantics=("parallel", "arbitrary"),
        vmem_limit_bytes=vmem_limit_bytes,
    )

    def resident_ok(cols):
        # Keep the streamed operand fully VMEM-resident (DMA'd once) when its double-buffered
        # footprint stays well under the budget; otherwise fall back to per-K streaming.
        return 2 * Np * cols * itemsize <= vmem_limit_bytes // 4

    # Phase 1: H1W2 = relu(A @ XW1 + b1) @ W2, K-tiled over adjacency columns.
    x_res = resident_ok(h1f)
    x_spec = (pl.BlockSpec((Np, h1f), lambda i, k: (0, 0)) if x_res
              else pl.BlockSpec((tile_k, h1f), lambda i, k: (k, 0)))
    h1w2 = pl.pallas_call(
        functools.partial(gcn_phase1_kernel, tile_k=tile_k, resident=x_res),
        out_shape=jax.ShapeDtypeStruct((Np, h2f), cdt),
        grid_spec=pltpu.PrefetchScalarGridSpec(
            num_scalar_prefetch=0,
            grid=(Np // tile_n, Np // tile_k),
            in_specs=[
                pl.BlockSpec((tile_n, tile_k), lambda i, k: (i, k)),  # A_hat tile
                x_spec,                                                # XW1 (resident or tiled)
                pl.BlockSpec((1, h1f), lambda i, k: (0, 0)),           # b1
                pl.BlockSpec((h1f, h2f), lambda i, k: (0, 0)),         # W2
            ],
            out_specs=pl.BlockSpec((tile_n, h2f), lambda i, k: (i, 0)),
            scratch_shapes=[pltpu.VMEM((tile_n, h1f), jnp.float32)],
        ),
        compiler_params=cparams,
    )(adj_c, xw1, b1_f, w2_c)

    # Phase 2: out = log_softmax((A @ H1W2 + b2) @ Wfc + bfc), K-tiled over adjacency columns.
    h_res = resident_ok(h2f)
    h_spec = (pl.BlockSpec((Np, h2f), lambda i, k: (0, 0)) if h_res
              else pl.BlockSpec((tile_k, h2f), lambda i, k: (k, 0)))
    out_p = pl.pallas_call(
        functools.partial(gcn_phase2_kernel, tile_k=tile_k, resident=h_res),
        out_shape=jax.ShapeDtypeStruct((Np, C), jnp.float32),
        grid_spec=pltpu.PrefetchScalarGridSpec(
            num_scalar_prefetch=0,
            grid=(Np // tile_n, Np // tile_k),
            in_specs=[
                pl.BlockSpec((tile_n, tile_k), lambda i, k: (i, k)),  # A_hat tile
                h_spec,                                                # H1W2 (resident or tiled)
                pl.BlockSpec((1, h2f), lambda i, k: (0, 0)),           # b2
                pl.BlockSpec((h2f, C), lambda i, k: (0, 0)),           # Wfc (class-padded)
                pl.BlockSpec((1, C), lambda i, k: (0, 0)),             # bfc (class-padded)
            ],
            out_specs=pl.BlockSpec((tile_n, C), lambda i, k: (i, 0)),
            scratch_shapes=[pltpu.VMEM((tile_n, h2f), jnp.float32)],
        ),
        compiler_params=cparams,
    )(adj_c, h1w2, b2_f, wfc_c, bfc_f)
    return out_p[:N, :ncls]


# ------------------------------------ reference ------------------------------------------

def reference_forward(adj, x, w1, b1, w2, b2, wfc, bfc, compute_dtype=jnp.float32,
                      hoist_xw1=False):
    cdt = jnp.dtype(compute_dtype)

    def mm(a, b):
        return jnp.dot(a.astype(cdt), b.astype(cdt), preferred_element_type=jnp.float32)

    if hoist_xw1:   # mirrors the kernel's computation order / intermediate casts exactly
        h1 = jnp.maximum(mm(adj, mm(x, w1).astype(cdt)) + b1, 0.0)
    else:           # natural PyTorch order: conv1 = (A @ X) @ W1 + b1
        h1 = jnp.maximum(mm(mm(adj, x), w1) + b1, 0.0)
    h1w2 = mm(h1, w2).astype(cdt)
    h2 = mm(adj, h1w2) + b2
    logits = mm(h2, wfc) + bfc
    return jax.nn.log_softmax(logits, axis=-1)


# --------------------------------------- main --------------------------------------------

if __name__ == "__main__":
    in_feats, h1_feats, h2_feats, num_classes = 64, 256, 128, 10

    def make_inputs(key, n):
        ks = jax.random.split(key, 8)
        # Random symmetric graph with self-loops, normalized: D^-1/2 A D^-1/2.
        a_raw = (jax.random.uniform(ks[0], (n, n)) < 0.05).astype(jnp.float32)
        a_sym = jnp.maximum(a_raw, a_raw.T)
        a_sym = jnp.maximum(a_sym, jnp.eye(n, dtype=jnp.float32))
        d_inv_sqrt = 1.0 / jnp.sqrt(jnp.sum(a_sym, axis=1))
        adj = a_sym * d_inv_sqrt[:, None] * d_inv_sqrt[None, :]
        x = jax.random.normal(ks[1], (n, in_feats), dtype=jnp.float32)
        w1 = jax.random.normal(ks[2], (in_feats, h1_feats), jnp.float32) / jnp.sqrt(float(in_feats))
        b1 = jax.random.normal(ks[3], (1, h1_feats), jnp.float32) * 0.01
        w2 = jax.random.normal(ks[4], (h1_feats, h2_feats), jnp.float32) / jnp.sqrt(float(h1_feats))
        b2 = jax.random.normal(ks[5], (1, h2_feats), jnp.float32) * 0.01
        wfc = jax.random.normal(ks[6], (h2_feats, num_classes), jnp.float32) / jnp.sqrt(float(h2_feats))
        bfc = jax.random.normal(ks[7], (1, num_classes), jnp.float32) * 0.01
        return adj, x, w1, b1, w2, b2, wfc, bfc

    key = jax.random.PRNGKey(0)
    k_small, k_big = jax.random.split(key)

    # 1) Small graph, mode="auto" (fused on 128 MiB parts, trivially-small fused on v7x), f32.
    args_small = make_inputs(k_small, 128)
    out_small = jax.block_until_ready(
        gcn_forward(*args_small, mode="auto", compute_dtype=jnp.float32))
    ref_small = reference_forward(*args_small)
    assert out_small.shape == (128, num_classes)
    assert bool(jnp.all(jnp.isfinite(out_small)))
    assert bool(jnp.allclose(out_small, ref_small, atol=1e-4, rtol=1e-4))

    # 2) Larger graph: tiled path with a multi-step K reduction (exercises resident slicing), f32.
    args_big = make_inputs(k_big, 512)
    out_tiled = jax.block_until_ready(
        gcn_forward(*args_big, mode="tiled", tile_n=128, tile_k=128,
                    compute_dtype=jnp.float32))
    ref_big = reference_forward(*args_big)
    assert out_tiled.shape == (512, num_classes)
    assert bool(jnp.all(jnp.isfinite(out_tiled)))
    assert bool(jnp.allclose(out_tiled, ref_big, atol=5e-4, rtol=5e-4))

    # 3) Larger graph, default (bigger) tiles, bf16 MXU inputs with f32 accumulation, compared
    #    against a reference that mirrors the same casts / operation order.
    out_bf16 = jax.block_until_ready(
        gcn_forward(*args_big, mode="tiled", compute_dtype=jnp.bfloat16))
    ref_bf16 = reference_forward(*args_big, compute_dtype=jnp.bfloat16, hoist_xw1=True)
    assert out_bf16.shape == (512, num_classes)
    assert bool(jnp.all(jnp.isfinite(out_bf16)))
    assert bool(jnp.allclose(out_bf16, ref_bf16, atol=5e-3, rtol=5e-3))

    print("KERNEL_OK")
</pallas_src>

<mosaic_0001>
module attributes {stable_mosaic.version = 11 : i64} {
  func.func @gcn_fused_kernel(%arg0: i32, %arg1: memref<128x128xf32, #tpu.memory_space<vmem>>, %arg2: memref<128x256xf32, #tpu.memory_space<vmem>>, %arg3: memref<1x256xf32, #tpu.memory_space<vmem>>, %arg4: memref<256x128xf32, #tpu.memory_space<vmem>>, %arg5: memref<1x128xf32, #tpu.memory_space<vmem>>, %arg6: memref<128x128xf32, #tpu.memory_space<vmem>>, %arg7: memref<1x128xf32, #tpu.memory_space<vmem>>, %arg8: memref<128x128xf32, #tpu.memory_space<vmem>>) attributes {dimension_semantics = [#tpu.dimension_semantics<arbitrary>], iteration_bounds = array<i64: 1>, scalar_prefetch = 0 : i64, scratch_operands = 0 : i64, tpu.core_type = #tpu.core_type<tc>, window_params = [{pipeline_mode = #tpu.pipeline_mode<synchronous>, transform_indices = @transform_0, window_bounds = array<i64: 128, 128>}, {pipeline_mode = #tpu.pipeline_mode<synchronous>, transform_indices = @transform_1, window_bounds = array<i64: 128, 256>}, {pipeline_mode = #tpu.pipeline_mode<synchronous>, transform_indices = @transform_2, window_bounds = array<i64: 1, 256>}, {pipeline_mode = #tpu.pipeline_mode<synchronous>, transform_indices = @transform_3, window_bounds = array<i64: 256, 128>}, {pipeline_mode = #tpu.pipeline_mode<synchronous>, transform_indices = @transform_4, window_bounds = array<i64: 1, 128>}, {pipeline_mode = #tpu.pipeline_mode<synchronous>, transform_indices = @transform_5, window_bounds = array<i64: 128, 128>}, {pipeline_mode = #tpu.pipeline_mode<synchronous>, transform_indices = @transform_6, window_bounds = array<i64: 1, 128>}, {pipeline_mode = #tpu.pipeline_mode<synchronous>, transform_indices = @transform_7, window_bounds = array<i64: 128, 128>}]} {
    %c0 = arith.constant 0 : index
    %c0_0 = arith.constant 0 : index
    %0 = vector.load %arg1[%c0, %c0_0] : memref<128x128xf32, #tpu.memory_space<vmem>>, vector<128x128xf32>
    %c0_1 = arith.constant 0 : index
    %c0_2 = arith.constant 0 : index
    %1 = vector.load %arg2[%c0_1, %c0_2] : memref<128x256xf32, #tpu.memory_space<vmem>>, vector<128x256xf32>
    %cst = arith.constant dense<0.000000e+00> : vector<128x256xf32>
    %2 = tpu.matmul %0, %1, %cst {dimension_numbers = #tpu.dot_dimension_numbers<[1], [0], [0], [1], [0, 0, 1, 1], [], []>} : vector<128x128xf32>, vector<128x256xf32>, vector<128x256xf32> -> vector<128x256xf32>
    %c0_3 = arith.constant 0 : index
    %c0_4 = arith.constant 0 : index
    %3 = vector.load %arg3[%c0_3, %c0_4] : memref<1x256xf32, #tpu.memory_space<vmem>>, vector<1x256xf32>
    %4 = vector.broadcast %3 : vector<1x256xf32> to vector<128x256xf32>
    %5 = arith.addf %2, %4 : vector<128x256xf32>
    %cst_5 = arith.constant 0.000000e+00 : f32
    %6 = vector.broadcast %cst_5 : f32 to vector<128x256xf32>
    %7 = arith.maximumf %5, %6 : vector<128x256xf32>
    %c0_6 = arith.constant 0 : index
    %c0_7 = arith.constant 0 : index
    %8 = vector.load %arg4[%c0_6, %c0_7] : memref<256x128xf32, #tpu.memory_space<vmem>>, vector<256x128xf32>
    %cst_8 = arith.constant dense<0.000000e+00> : vector<128x128xf32>
    %9 = tpu.matmul %7, %8, %cst_8 {dimension_numbers = #tpu.dot_dimension_numbers<[1], [0], [0], [1], [0, 0, 1, 1], [], []>} : vector<128x256xf32>, vector<256x128xf32>, vector<128x128xf32> -> vector<128x128xf32>
    %c0_9 = arith.constant 0 : index
    %c0_10 = arith.constant 0 : index
    %10 = vector.load %arg1[%c0_9, %c0_10] : memref<128x128xf32, #tpu.memory_space<vmem>>, vector<128x128xf32>
    %cst_11 = arith.constant dense<0.000000e+00> : vector<128x128xf32>
    %11 = tpu.matmul %10, %9, %cst_11 {dimension_numbers = #tpu.dot_dimension_numbers<[1], [0], [0], [1], [0, 0, 1, 1], [], []>} : vector<128x128xf32>, vector<128x128xf32>, vector<128x128xf32> -> vector<128x128xf32>
    %c0_12 = arith.constant 0 : index
    %c0_13 = arith.constant 0 : index
    %12 = vector.load %arg5[%c0_12, %c0_13] : memref<1x128xf32, #tpu.memory_space<vmem>>, vector<1x128xf32>
    %13 = vector.broadcast %12 : vector<1x128xf32> to vector<128x128xf32>
    %14 = arith.addf %11, %13 : vector<128x128xf32>
    %c0_14 = arith.constant 0 : index
    %c0_15 = arith.constant 0 : index
    %15 = vector.load %arg6[%c0_14, %c0_15] : memref<128x128xf32, #tpu.memory_space<vmem>>, vector<128x128xf32>
    %cst_16 = arith.constant dense<0.000000e+00> : vector<128x128xf32>
    %16 = tpu.matmul %14, %15, %cst_16 {dimension_numbers = #tpu.dot_dimension_numbers<[1], [0], [0], [1], [0, 0, 1, 1], [], []>} : vector<128x128xf32>, vector<128x128xf32>, vector<128x128xf32> -> vector<128x128xf32>
    %c0_17 = arith.constant 0 : index
    %c0_18 = arith.constant 0 : index
    %17 = vector.load %arg7[%c0_17, %c0_18] : memref<1x128xf32, #tpu.memory_space<vmem>>, vector<1x128xf32>
    %18 = vector.broadcast %17 : vector<1x128xf32> to vector<128x128xf32>
    %19 = arith.addf %16, %18 : vector<128x128xf32>
    %cst_19 = arith.constant dense<0xFF800000> : vector<128xf32>
    %20 = vector.multi_reduction <maximumf>, %19, %cst_19 [1] : vector<128x128xf32> to vector<128xf32>
    %21 = vector.shape_cast %20 : vector<128xf32> to vector<128x1xf32>
    %22 = vector.broadcast %21 : vector<128x1xf32> to vector<128x128xf32>
    %23 = arith.subf %19, %22 : vector<128x128xf32>
    %24 = math.exp %23 : vector<128x128xf32>
    %cst_20 = arith.constant dense<0.000000e+00> : vector<128xf32>
    %25 = vector.multi_reduction <add>, %24, %cst_20 [1] : vector<128x128xf32> to vector<128xf32>
    %26 = vector.shape_cast %25 : vector<128xf32> to vector<128x1xf32>
    %27 = math.log %26 : vector<128x1xf32>
    %28 = vector.broadcast %27 : vector<128x1xf32> to vector<128x128xf32>
    %29 = arith.subf %23, %28 : vector<128x128xf32>
    %c0_21 = arith.constant 0 : index
    %c0_22 = arith.constant 0 : index
    %30 = vector.load %arg8[%c0_21, %c0_22] : memref<128x128xf32, #tpu.memory_space<vmem>>, vector<128x128xf32>
    tpu.vector_store %arg8[%c0_21, %c0_22], %29 {strides = array<i32>} : memref<128x128xf32, #tpu.memory_space<vmem>>, vector<128x128xf32>,
    return
  }
  func.func @transform_0(%arg0: i32) -> (i32, i32) {
    %c0_i32 = arith.constant 0 : i32
    %c0_i32_0 = arith.constant 0 : i32
    %c0_i32_1 = arith.constant 0 : i32
    return %c0_i32, %c0_i32_0 : i32, i32
  }
  func.func @transform_1(%arg0: i32) -> (i32, i32) {
    %c0_i32 = arith.constant 0 : i32
    %c0_i32_0 = arith.constant 0 : i32
    %c0_i32_1 = arith.constant 0 : i32
    return %c0_i32, %c0_i32_0 : i32, i32
  }
  func.func @transform_2(%arg0: i32) -> (i32, i32) {
    %c0_i32 = arith.constant 0 : i32
    %c0_i32_0 = arith.constant 0 : i32
    %c0_i32_1 = arith.constant 0 : i32
    return %c0_i32, %c0_i32_0 : i32, i32
  }
  func.func @transform_3(%arg0: i32) -> (i32, i32) {
    %c0_i32 = arith.constant 0 : i32
    %c0_i32_0 = arith.constant 0 : i32
    %c0_i32_1 = arith.constant 0 : i32
    return %c0_i32, %c0_i32_0 : i32, i32
  }
  func.func @transform_4(%arg0: i32) -> (i32, i32) {
    %c0_i32 = arith.constant 0 : i32
    %c0_i32_0 = arith.constant 0 : i32
    %c0_i32_1 = arith.constant 0 : i32
    return %c0_i32, %c0_i32_0 : i32, i32
  }
  func.func @transform_5(%arg0: i32) -> (i32, i32) {
    %c0_i32 = arith.constant 0 : i32
    %c0_i32_0 = arith.constant 0 : i32
    %c0_i32_1 = arith.constant 0 : i32
    return %c0_i32, %c0_i32_0 : i32, i32
  }
  func.func @transform_6(%arg0: i32) -> (i32, i32) {
    %c0_i32 = arith.constant 0 : i32
    %c0_i32_0 = arith.constant 0 : i32
    %c0_i32_1 = arith.constant 0 : i32
    return %c0_i32, %c0_i32_0 : i32, i32
  }
  func.func @transform_7(%arg0: i32) -> (i32, i32) {
    %c0_i32 = arith.constant 0 : i32
    %c0_i32_0 = arith.constant 0 : i32
    %c0_i32_1 = arith.constant 0 : i32
    return %c0_i32, %c0_i32_0 : i32, i32
  }
}

</mosaic_0001>

<llo_original>
// kernel: tpu_custom_call.1
$region0: #{tpu_custom_call.1}
  #allocation0 [shape = 'u32[]', space=smem, size = 0x4, offset = 0x4, fixed_abs, tag = 'smem constant byte address 0x4 - core index']
  #allocation1 [shape = 'u32[72,128]{1,0:T(1,128)}', space=vmem, size = 0x9000, scoped, tag = 'internal scratch']
  %s0 = inlined_call_operand.hbm [shape: f32[128,128], index: 0, kind: input, shape index: {}]
  %s1 = inlined_call_operand.hbm [shape: f32[128,256], index: 1, kind: input, shape index: {}]
  %s2 = inlined_call_operand.hbm [shape: f32[1,256], index: 2, kind: input, shape index: {}]
  %s3 = inlined_call_operand.hbm [shape: f32[256,128], index: 3, kind: input, shape index: {}]
  %s4 = inlined_call_operand.vmem [shape: f32[1,128], index: 4, kind: input, shape index: {}]
  %s5 = inlined_call_operand.hbm [shape: f32[128,128], index: 5, kind: input, shape index: {}]
  %s6 = inlined_call_operand.vmem [shape: f32[1,128], index: 6, kind: input, shape index: {}]
  %s7 = inlined_call_operand.hbm [shape: f32[128,128], index: 7, kind: output, shape index: {}]
  %s8 = sld [smem:[#allocation0]]
  $region58: #{tpu_custom_call.1} parent=0
    _
  %s10 = ssub.s32 1, %s8
  %s11 = scalar_select 0, %s10, %s8
  $region1: #{tpu_custom_call.1} parent=0
    #allocation2 [shape = 'u8[65536]{0}', space=vmem, size = 0x10000, scoped, tag = 'input window, operand 0, single buffered']
    #allocation3 [shape = 's32[1]{0}', space=sflag, size = 0x4, scoped, tag = 'scoped memory for tpu_custom_call.1']
    #allocation4 [shape = 's32[1]{0}', space=sflag, size = 0x4, scoped, tag = 'scoped memory for tpu_custom_call.1']
    #allocation5 [shape = 'u8[131072]{0}', space=vmem, size = 0x20000, scoped, tag = 'input window, operand 1, single buffered']
    #allocation6 [shape = 's32[1]{0}', space=sflag, size = 0x4, scoped, tag = 'scoped memory for tpu_custom_call.1']
    #allocation7 [shape = 'u8[1024]{0}', space=vmem, size = 0x400, scoped, tag = 'input window, operand 2, single buffered']
    #allocation8 [shape = 'u8[131072]{0}', space=vmem, size = 0x20000, scoped, tag = 'input window, operand 3, single buffered']
    #allocation9 [shape = 's32[1]{0}', space=sflag, size = 0x4, scoped, tag = 'scoped memory for tpu_custom_call.1']
    #allocation10 [shape = 'u8[65536]{0}', space=vmem, size = 0x10000, scoped, tag = 'input window, operand 5, single buffered']
    #allocation11 [shape = 'u8[65536]{0}', space=vmem, size = 0x10000, scoped, tag = 'output window, operand 0, single buffered']
    %12 = vsyncpa [#allocation3], 0
    %13 = vsyncpa [#allocation6], 0
    %14 = vsyncpa [#allocation9], 0
    %15 = vsyncpa [#allocation4], 0
    // Predicated region
    $region2: #{tpu_custom_call.1} parent=1 // pred_check
      _
    $region3: #{tpu_custom_call.1} parent=1 // pred_check_branch
      %17 = sbr.rel (0) target = $region5
    $region4: #{tpu_custom_call.1} parent=1 // pred_region
      %19 = vsyncadd [#allocation3], 0
      %s20 = sshll.u32 %s0, 4
      %s21 = int_to_ptr.hbm [resolvable:$true] %s20
      %s22 = sshll.u32 [#allocation2], 4
      %s23 = int_to_ptr.vmem [resolvable:$true] %s22
      %28 = dma.hbm_to_vmem [thread:$0]  %s21, 2048, %s23, [#allocation3], 128, 128, 8
    $region5: #{tpu_custom_call.1} parent=1 // pred_fallthru
      _
    // Predicated region
    $region6: #{tpu_custom_call.1} parent=1 // pred_check
      _
    $region7: #{tpu_custom_call.1} parent=1 // pred_check_branch
      %30 = sbr.rel (0) target = $region9
    $region8: #{tpu_custom_call.1} parent=1 // pred_region
      %32 = vsyncadd [#allocation6], 0
      %s33 = sshll.u32 %s1, 4
      %s34 = int_to_ptr.hbm [resolvable:$true] %s33
      %s35 = sshll.u32 [#allocation5], 4
      %s36 = int_to_ptr.vmem [resolvable:$true] %s35
      %41 = dma.hbm_to_vmem [thread:$0]  %s34, 4096, %s36, [#allocation6], 256, 256, 16
    $region9: #{tpu_custom_call.1} parent=1 // pred_fallthru
      _
    // Predicated region
    $region10: #{tpu_custom_call.1} parent=1 // pred_check
      _
    $region11: #{tpu_custom_call.1} parent=1 // pred_check_branch
      %43 = sbr.rel (0) target = $region13
    $region12: #{tpu_custom_call.1} parent=1 // pred_region
      %45 = vsyncadd [#allocation6], 0
      %s47 = sshll.u32 %s2, 4
      %s48 = int_to_ptr.hbm [resolvable:$true] %s47
      %s49 = sshll.u32 [#allocation7], 4
      %s50 = int_to_ptr.vmem [resolvable:$true] %s49
      %52 = dma.hbm_to_vmem [thread:$0]  %s48, 32, %s50, [#allocation6]
    $region13: #{tpu_custom_call.1} parent=1 // pred_fallthru
      _
    // Predicated region
    $region14: #{tpu_custom_call.1} parent=1 // pred_check
      _
    $region15: #{tpu_custom_call.1} parent=1 // pred_check_branch
      %54 = sbr.rel (0) target = $region17
    $region16: #{tpu_custom_call.1} parent=1 // pred_region
      %56 = vsyncadd [#allocation9], 0
      %s57 = sshll.u32 %s3, 4
      %s58 = int_to_ptr.hbm [resolvable:$true] %s57
      %s59 = sshll.u32 [#allocation8], 4
      %s60 = int_to_ptr.vmem [resolvable:$true] %s59
      %65 = dma.hbm_to_vmem [thread:$0]  %s58, 4096, %s60, [#allocation9], 128, 128, 8
    $region17: #{tpu_custom_call.1} parent=1 // pred_fallthru
      _
    // Predicated region
    $region18: #{tpu_custom_call.1} parent=1 // pred_check
      _
    $region19: #{tpu_custom_call.1} parent=1 // pred_check_branch
      %67 = sbr.rel (0) target = $region21
    $region20: #{tpu_custom_call.1} parent=1 // pred_region
      _
    $region21: #{tpu_custom_call.1} parent=1 // pred_fallthru
      _
    // Predicated region
    $region22: #{tpu_custom_call.1} parent=1 // pred_check
      _
    $region23: #{tpu_custom_call.1} parent=1 // pred_check_branch
      %69 = sbr.rel (0) target = $region25
    $region24: #{tpu_custom_call.1} parent=1 // pred_region
      %71 = vsyncadd [#allocation9], 0
      %s72 = sshll.u32 %s5, 4
      %s73 = int_to_ptr.hbm [resolvable:$true] %s72
      %s74 = sshll.u32 [#allocation10], 4
      %s75 = int_to_ptr.vmem [resolvable:$true] %s74
      %80 = dma.hbm_to_vmem [thread:$0]  %s73, 2048, %s75, [#allocation9], 128, 128, 8
    $region25: #{tpu_custom_call.1} parent=1 // pred_fallthru
      _
    // Predicated region
    $region26: #{tpu_custom_call.1} parent=1 // pred_check
      _
    $region27: #{tpu_custom_call.1} parent=1 // pred_check_branch
      %82 = sbr.rel (0) target = $region29
    $region28: #{tpu_custom_call.1} parent=1 // pred_region
      _
    $region29: #{tpu_custom_call.1} parent=1 // pred_fallthru
      _
    // Predicated region
    $region30: #{tpu_custom_call.1} parent=1 // pred_check
      _
    $region31: #{tpu_custom_call.1} parent=1 // pred_check_branch
      %84 = sbr.rel (0) target = $region33
    $region32: #{tpu_custom_call.1} parent=1 // pred_region
      %86 = dma.done [#allocation3], 2048
    $region33: #{tpu_custom_call.1} parent=1 // pred_fallthru
      _
    // Predicated region
    $region34: #{tpu_custom_call.1} parent=1 // pred_check
      _
    $region35: #{tpu_custom_call.1} parent=1 // pred_check_branch
      %88 = sbr.rel (0) target = $region37
    $region36: #{tpu_custom_call.1} parent=1 // pred_region
      %90 = dma.done [#allocation6], 4096
    $region37: #{tpu_custom_call.1} parent=1 // pred_fallthru
      _
    // Predicated region
    $region38: #{tpu_custom_call.1} parent=1 // pred_check
      _
    $region39: #{tpu_custom_call.1} parent=1 // pred_check_branch
      %92 = sbr.rel (0) target = $region41
    $region40: #{tpu_custom_call.1} parent=1 // pred_region
      %94 = dma.done [#allocation6], 32
    $region41: #{tpu_custom_call.1} parent=1 // pred_fallthru
      _
    // Predicated region
    $region42: #{tpu_custom_call.1} parent=1 // pred_check
      _
    $region43: #{tpu_custom_call.1} parent=1 // pred_check_branch
      %96 = sbr.rel (0) target = $region45
    $region44: #{tpu_custom_call.1} parent=1 // pred_region
      %98 = dma.done [#allocation9], 4096
    $region45: #{tpu_custom_call.1} parent=1 // pred_fallthru
      _
    // Predicated region
    $region46: #{tpu_custom_call.1} parent=1 // pred_check
      _
    $region47: #{tpu_custom_call.1} parent=1 // pred_check_branch
      %100 = sbr.rel (0) target = $region49
    $region48: #{tpu_custom_call.1} parent=1 // pred_region
      %102 = dma.done [#allocation9], 2048
    $region49: #{tpu_custom_call.1} parent=1 // pred_fallthru
      _
    %v103 = vld [vmem:[#allocation2] sm:$0xff]
    %v104 = vld [vmem:[#allocation2 + $0x8] sm:$0xff]
    %v105 = vld [vmem:[#allocation2 + $0x10] sm:$0xff]
    %v106 = vld [vmem:[#allocation2 + $0x18] sm:$0xff]
    %v107 = vld [vmem:[#allocation2 + $0x20] sm:$0xff]
    %v108 = vld [vmem:[#allocation2 + $0x28] sm:$0xff]
    %v109 = vld [vmem:[#allocation2 + $0x30] sm:$0xff]
    %v110 = vld [vmem:[#allocation2 + $0x38] sm:$0xff]
    %v111 = vld [vmem:[#allocation2 + $0x40] sm:$0xff]
    %v112 = vld [vmem:[#allocation2 + $0x48] sm:$0xff]
    %v113 = vld [vmem:[#allocation2 + $0x50] sm:$0xff]
    %v114 = vld [vmem:[#allocation2 + $0x58] sm:$0xff]
    %v115 = vld [vmem:[#allocation2 + $0x60] sm:$0xff]
    %v116 = vld [vmem:[#allocation2 + $0x68] sm:$0xff]
    %v117 = vld [vmem:[#allocation2 + $0x70] sm:$0xff]
    %v118 = vld [vmem:[#allocation2 + $0x78] sm:$0xff]
    %v119 = vld [vmem:[#allocation5] sm:$0xff]
    %v120 = vld [vmem:[#allocation5 + $0x8] sm:$0xff]
    %v121 = vld [vmem:[#allocation5 + $0x10] sm:$0xff]
    %v122 = vld [vmem:[#allocation5 + $0x18] sm:$0xff]
    %v123 = vld [vmem:[#allocation5 + $0x20] sm:$0xff]
    %v124 = vld [vmem:[#allocation5 + $0x28] sm:$0xff]
    %v125 = vld [vmem:[#allocation5 + $0x30] sm:$0xff]
    %v126 = vld [vmem:[#allocation5 + $0x38] sm:$0xff]
    %v127 = vld [vmem:[#allocation5 + $0x40] sm:$0xff]
    %v128 = vld [vmem:[#allocation5 + $0x48] sm:$0xff]
    %v129 = vld [vmem:[#allocation5 + $0x50] sm:$0xff]
    %v130 = vld [vmem:[#allocation5 + $0x58] sm:$0xff]
    %v131 = vld [vmem:[#allocation5 + $0x60] sm:$0xff]
    %v132 = vld [vmem:[#allocation5 + $0x68] sm:$0xff]
    %v133 = vld [vmem:[#allocation5 + $0x70] sm:$0xff]
    %v134 = vld [vmem:[#allocation5 + $0x78] sm:$0xff]
    %v135 = vld [vmem:[#allocation5 + $0x80] sm:$0xff]
    %v136 = vld [vmem:[#allocation5 + $0x88] sm:$0xff]
    %v137 = vld [vmem:[#allocation5 + $0x90] sm:$0xff]
    %v138 = vld [vmem:[#allocation5 + $0x98] sm:$0xff]
    %v139 = vld [vmem:[#allocation5 + $0xa0] sm:$0xff]
    %v140 = vld [vmem:[#allocation5 + $0xa8] sm:$0xff]
    %v141 = vld [vmem:[#allocation5 + $0xb0] sm:$0xff]
    %v142 = vld [vmem:[#allocation5 + $0xb8] sm:$0xff]
    %v143 = vld [vmem:[#allocation5 + $0xc0] sm:$0xff]
    %v144 = vld [vmem:[#allocation5 + $0xc8] sm:$0xff]
    %v145 = vld [vmem:[#allocation5 + $0xd0] sm:$0xff]
    %v146 = vld [vmem:[#allocation5 + $0xd8] sm:$0xff]
    %v147 = vld [vmem:[#allocation5 + $0xe0] sm:$0xff]
    %v148 = vld [vmem:[#allocation5 + $0xe8] sm:$0xff]
    %v149 = vld [vmem:[#allocation5 + $0xf0] sm:$0xff]
    %v150 = vld [vmem:[#allocation5 + $0xf8] sm:$0xff]
    %v151 = vld [vmem:[#allocation7] sm:$0x3]
    %v153 = vperm.slane %v151, 0
    %v154 = vperm.slane %v151, 1
    %157 = vmatpush.msra.mxu0 %v149
    %158 = vmatpush.msra.mxu0 %v147
    %159 = vmatpush.msra.mxu0 %v145
    %160 = vmatpush.msra.mxu0 %v143
    %161 = vmatpush.msra.mxu0 %v141
    %162 = vmatpush.msra.mxu0 %v139
    %163 = vmatpush.msra.mxu0 %v137
    %164 = vmatpush.msra.mxu0 %v135
    %165 = vmatpush.msra.mxu0 %v133
    %166 = vmatpush.msra.mxu0 %v131
    %167 = vmatpush.msra.mxu0 %v129
    %168 = vmatpush.msra.mxu0 %v127
    %169 = vmatpush.msra.mxu0 %v125
    %170 = vmatpush.msra.mxu0 %v123
    %171 = vmatpush.msra.mxu0 %v121
    %172 = vmatpush.msra.mxu0 %v119
    %173 = vmatmul.f32.gmra.mxu0 %v103
    %v174 = vpop.f32.mrf.mxu0
    %v175 = vadd.f32 %v153, %v174
    %176 = vmatmul.f32.gmra.mxu0 %v104
    %v177 = vpop.f32.mrf.mxu0
    %v178 = vadd.f32 %v153, %v177
    %179 = vmatmul.f32.gmra.mxu0 %v105
    %v180 = vpop.f32.mrf.mxu0
    %v181 = vadd.f32 %v153, %v180
    %182 = vmatmul.f32.gmra.mxu0 %v106
    %v183 = vpop.f32.mrf.mxu0
    %v184 = vadd.f32 %v153, %v183
    %185 = vmatmul.f32.gmra.mxu0 %v107
    %v186 = vpop.f32.mrf.mxu0
    %v187 = vadd.f32 %v153, %v186
    %188 = vmatmul.f32.gmra.mxu0 %v108
    %v189 = vpop.f32.mrf.mxu0
    %v190 = vadd.f32 %v153, %v189
    %191 = vmatmul.f32.gmra.mxu0 %v109
    %v192 = vpop.f32.mrf.mxu0
    %v193 = vadd.f32 %v153, %v192
    %194 = vmatmul.f32.gmra.mxu0 %v110
    %v195 = vpop.f32.mrf.mxu0
    %v196 = vadd.f32 %v153, %v195
    %197 = vmatmul.f32.gmra.mxu0 %v111
    %v198 = vpop.f32.mrf.mxu0
    %v199 = vadd.f32 %v153, %v198
    %200 = vmatmul.f32.gmra.mxu0 %v112
    %v201 = vpop.f32.mrf.mxu0
    %v202 = vadd.f32 %v153, %v201
    %203 = vmatmul.f32.gmra.mxu0 %v113
    %v204 = vpop.f32.mrf.mxu0
    %v205 = vadd.f32 %v153, %v204
    %206 = vmatmul.f32.gmra.mxu0 %v114
    %v207 = vpop.f32.mrf.mxu0
    %v208 = vadd.f32 %v153, %v207
    %209 = vmatmul.f32.gmra.mxu0 %v115
    %v210 = vpop.f32.mrf.mxu0
    %v211 = vadd.f32 %v153, %v210
    %212 = vmatmul.f32.gmra.mxu0 %v116
    %v213 = vpop.f32.mrf.mxu0
    %v214 = vadd.f32 %v153, %v213
    %215 = vmatmul.f32.gmra.mxu0 %v117
    %v216 = vpop.f32.mrf.mxu0
    %v217 = vadd.f32 %v153, %v216
    %218 = vmatmul.f32.gmra.mxu0 %v118
    %v219 = vpop.f32.mrf.mxu0
    %v220 = vadd.f32 %v153, %v219
    %221 = vdwg.mxu0
    %222 = vmatpush.msra.mxu0 %v150
    %223 = vmatpush.msra.mxu0 %v148
    %224 = vmatpush.msra.mxu0 %v146
    %225 = vmatpush.msra.mxu0 %v144
    %226 = vmatpush.msra.mxu0 %v142
    %227 = vmatpush.msra.mxu0 %v140
    %228 = vmatpush.msra.mxu0 %v138
    %229 = vmatpush.msra.mxu0 %v136
    %230 = vmatpush.msra.mxu0 %v134
    %231 = vmatpush.msra.mxu0 %v132
    %232 = vmatpush.msra.mxu0 %v130
    %233 = vmatpush.msra.mxu0 %v128
    %234 = vmatpush.msra.mxu0 %v126
    %235 = vmatpush.msra.mxu0 %v124
    %236 = vmatpush.msra.mxu0 %v122
    %237 = vmatpush.msra.mxu0 %v120
    %238 = vmatmul.f32.gmra.mxu0 %v103
    %v239 = vpop.f32.mrf.mxu0
    %v240 = vadd.f32 %v154, %v239
    %241 = vmatmul.f32.gmra.mxu0 %v104
    %v242 = vpop.f32.mrf.mxu0
    %v243 = vadd.f32 %v154, %v242
    %244 = vmatmul.f32.gmra.mxu0 %v105
    %v245 = vpop.f32.mrf.mxu0
    %v246 = vadd.f32 %v154, %v245
    %247 = vmatmul.f32.gmra.mxu0 %v106
    %v248 = vpop.f32.mrf.mxu0
    %v249 = vadd.f32 %v154, %v248
    %250 = vmatmul.f32.gmra.mxu0 %v107
    %v251 = vpop.f32.mrf.mxu0
    %v252 = vadd.f32 %v154, %v251
    %253 = vmatmul.f32.gmra.mxu0 %v108
    %v254 = vpop.f32.mrf.mxu0
    %v255 = vadd.f32 %v154, %v254
    %256 = vmatmul.f32.gmra.mxu0 %v109
    %v257 = vpop.f32.mrf.mxu0
    %v258 = vadd.f32 %v154, %v257
    %259 = vmatmul.f32.gmra.mxu0 %v110
    %v260 = vpop.f32.mrf.mxu0
    %v261 = vadd.f32 %v154, %v260
    %262 = vmatmul.f32.gmra.mxu0 %v111
    %v263 = vpop.f32.mrf.mxu0
    %v264 = vadd.f32 %v154, %v263
    %265 = vmatmul.f32.gmra.mxu0 %v112
    %v266 = vpop.f32.mrf.mxu0
    %v267 = vadd.f32 %v154, %v266
    %268 = vmatmul.f32.gmra.mxu0 %v113
    %v269 = vpop.f32.mrf.mxu0
    %v270 = vadd.f32 %v154, %v269
    %271 = vmatmul.f32.gmra.mxu0 %v114
    %v272 = vpop.f32.mrf.mxu0
    %v273 = vadd.f32 %v154, %v272
    %274 = vmatmul.f32.gmra.mxu0 %v115
    %v275 = vpop.f32.mrf.mxu0
    %v276 = vadd.f32 %v154, %v275
    %277 = vmatmul.f32.gmra.mxu0 %v116
    %v278 = vpop.f32.mrf.mxu0
    %v279 = vadd.f32 %v154, %v278
    %280 = vmatmul.f32.gmra.mxu0 %v117
    %v281 = vpop.f32.mrf.mxu0
    %v282 = vadd.f32 %v154, %v281
    %283 = vmatmul.f32.gmra.mxu0 %v118
    %v284 = vpop.f32.mrf.mxu0
    %v285 = vadd.f32 %v154, %v284
    %286 = vdwg.mxu0
    %v287 = vmax.f32 %v175, 0.0
    %v288 = vmax.f32 %v240, 0.0
    %v289 = vmax.f32 %v178, 0.0
    %v290 = vmax.f32 %v243, 0.0
    %v291 = vmax.f32 %v181, 0.0
    %v292 = vmax.f32 %v246, 0.0
    %v293 = vmax.f32 %v184, 0.0
    %v294 = vmax.f32 %v249, 0.0
    %v295 = vmax.f32 %v187, 0.0
    %v296 = vmax.f32 %v252, 0.0
    %v297 = vmax.f32 %v190, 0.0
    %v298 = vmax.f32 %v255, 0.0
    %v299 = vmax.f32 %v193, 0.0
    %v300 = vmax.f32 %v258, 0.0
    %v301 = vmax.f32 %v196, 0.0
    %v302 = vmax.f32 %v261, 0.0
    %v303 = vmax.f32 %v199, 0.0
    %v304 = vmax.f32 %v264, 0.0
    %v305 = vmax.f32 %v202, 0.0
    %v306 = vmax.f32 %v267, 0.0
    %v307 = vmax.f32 %v205, 0.0
    %v308 = vmax.f32 %v270, 0.0
    %v309 = vmax.f32 %v208, 0.0
    %v310 = vmax.f32 %v273, 0.0
    %v311 = vmax.f32 %v211, 0.0
    %v312 = vmax.f32 %v276, 0.0
    %v313 = vmax.f32 %v214, 0.0
    %v314 = vmax.f32 %v279, 0.0
    %v315 = vmax.f32 %v217, 0.0
    %v316 = vmax.f32 %v282, 0.0
    %v317 = vmax.f32 %v220, 0.0
    %v318 = vmax.f32 %v285, 0.0
    %v319 = vld [vmem:[#allocation8] sm:$0xff]
    %v320 = vld [vmem:[#allocation8 + $0x8] sm:$0xff]
    %v321 = vld [vmem:[#allocation8 + $0x10] sm:$0xff]
    %v322 = vld [vmem:[#allocation8 + $0x18] sm:$0xff]
    %v323 = vld [vmem:[#allocation8 + $0x20] sm:$0xff]
    %v324 = vld [vmem:[#allocation8 + $0x28] sm:$0xff]
    %v325 = vld [vmem:[#allocation8 + $0x30] sm:$0xff]
    %v326 = vld [vmem:[#allocation8 + $0x38] sm:$0xff]
    %v327 = vld [vmem:[#allocation8 + $0x40] sm:$0xff]
    %v328 = vld [vmem:[#allocation8 + $0x48] sm:$0xff]
    %v329 = vld [vmem:[#allocation8 + $0x50] sm:$0xff]
    %v330 = vld [vmem:[#allocation8 + $0x58] sm:$0xff]
    %v331 = vld [vmem:[#allocation8 + $0x60] sm:$0xff]
    %v332 = vld [vmem:[#allocation8 + $0x68] sm:$0xff]
    %v333 = vld [vmem:[#allocation8 + $0x70] sm:$0xff]
    %v334 = vld [vmem:[#allocation8 + $0x78] sm:$0xff]
    %v335 = vld [vmem:[#allocation8 + $0x80] sm:$0xff]
    %v336 = vld [vmem:[#allocation8 + $0x88] sm:$0xff]
    %v337 = vld [vmem:[#allocation8 + $0x90] sm:$0xff]
    %v338 = vld [vmem:[#allocation8 + $0x98] sm:$0xff]
    %v339 = vld [vmem:[#allocation8 + $0xa0] sm:$0xff]
    %v340 = vld [vmem:[#allocation8 + $0xa8] sm:$0xff]
    %v341 = vld [vmem:[#allocation8 + $0xb0] sm:$0xff]
    %v342 = vld [vmem:[#allocation8 + $0xb8] sm:$0xff]
    %v343 = vld [vmem:[#allocation8 + $0xc0] sm:$0xff]
    %v344 = vld [vmem:[#allocation8 + $0xc8] sm:$0xff]
    %v345 = vld [vmem:[#allocation8 + $0xd0] sm:$0xff]
    %v346 = vld [vmem:[#allocation8 + $0xd8] sm:$0xff]
    %v347 = vld [vmem:[#allocation8 + $0xe0] sm:$0xff]
    %v348 = vld [vmem:[#allocation8 + $0xe8] sm:$0xff]
    %v349 = vld [vmem:[#allocation8 + $0xf0] sm:$0xff]
    %v350 = vld [vmem:[#allocation8 + $0xf8] sm:$0xff]
    %351 = vmatpush.msra.mxu0 %v334
    %352 = vmatpush.msra.mxu0 %v333
    %353 = vmatpush.msra.mxu0 %v332
    %354 = vmatpush.msra.mxu0 %v331
    %355 = vmatpush.msra.mxu0 %v330
    %356 = vmatpush.msra.mxu0 %v329
    %357 = vmatpush.msra.mxu0 %v328
    %358 = vmatpush.msra.mxu0 %v327
    %359 = vmatpush.msra.mxu0 %v326
    %360 = vmatpush.msra.mxu0 %v325
    %361 = vmatpush.msra.mxu0 %v324
    %362 = vmatpush.msra.mxu0 %v323
    %363 = vmatpush.msra.mxu0 %v322
    %364 = vmatpush.msra.mxu0 %v321
    %365 = vmatpush.msra.mxu0 %v320
    %366 = vmatpush.msra.mxu0 %v319
    %367 = vmatmul.f32.gmra.mxu0 %v287
    %v368 = vpop.f32.mrf.mxu0
    %v369 = vadd.f32 0.0, %v368
    %370 = vmatmul.f32.gmra.mxu0 %v289
    %v371 = vpop.f32.mrf.mxu0
    %v372 = vadd.f32 0.0, %v371
    %373 = vmatmul.f32.gmra.mxu0 %v291
    %v374 = vpop.f32.mrf.mxu0
    %v375 = vadd.f32 0.0, %v374
    %376 = vmatmul.f32.gmra.mxu0 %v293
    %v377 = vpop.f32.mrf.mxu0
    %v378 = vadd.f32 0.0, %v377
    %379 = vmatmul.f32.gmra.mxu0 %v295
    %v380 = vpop.f32.mrf.mxu0
    %v381 = vadd.f32 0.0, %v380
    %382 = vmatmul.f32.gmra.mxu0 %v297
    %v383 = vpop.f32.mrf.mxu0
    %v384 = vadd.f32 0.0, %v383
    %385 = vmatmul.f32.gmra.mxu0 %v299
    %v386 = vpop.f32.mrf.mxu0
    %v387 = vadd.f32 0.0, %v386
    %388 = vmatmul.f32.gmra.mxu0 %v301
    %v389 = vpop.f32.mrf.mxu0
    %v390 = vadd.f32 0.0, %v389
    %391 = vmatmul.f32.gmra.mxu0 %v303
    %v392 = vpop.f32.mrf.mxu0
    %v393 = vadd.f32 0.0, %v392
    %394 = vmatmul.f32.gmra.mxu0 %v305
    %v395 = vpop.f32.mrf.mxu0
    %v396 = vadd.f32 0.0, %v395
    %397 = vmatmul.f32.gmra.mxu0 %v307
    %v398 = vpop.f32.mrf.mxu0
    %v399 = vadd.f32 0.0, %v398
    %400 = vmatmul.f32.gmra.mxu0 %v309
    %v401 = vpop.f32.mrf.mxu0
    %v402 = vadd.f32 0.0, %v401
    %403 = vmatmul.f32.gmra.mxu0 %v311
    %v404 = vpop.f32.mrf.mxu0
    %v405 = vadd.f32 0.0, %v404
    %406 = vmatmul.f32.gmra.mxu0 %v313
    %v407 = vpop.f32.mrf.mxu0
    %v408 = vadd.f32 0.0, %v407
    %409 = vmatmul.f32.gmra.mxu0 %v315
    %v410 = vpop.f32.mrf.mxu0
    %v411 = vadd.f32 0.0, %v410
    %412 = vmatmul.f32.gmra.mxu0 %v317
    %v413 = vpop.f32.mrf.mxu0
    %v414 = vadd.f32 0.0, %v413
    %415 = vdwg.mxu0
    %416 = vmatpush.msra.mxu0 %v350
    %417 = vmatpush.msra.mxu0 %v349
    %418 = vmatpush.msra.mxu0 %v348
    %419 = vmatpush.msra.mxu0 %v347
    %420 = vmatpush.msra.mxu0 %v346
    %421 = vmatpush.msra.mxu0 %v345
    %422 = vmatpush.msra.mxu0 %v344
    %423 = vmatpush.msra.mxu0 %v343
    %424 = vmatpush.msra.mxu0 %v342
    %425 = vmatpush.msra.mxu0 %v341
    %426 = vmatpush.msra.mxu0 %v340
    %427 = vmatpush.msra.mxu0 %v339
    %428 = vmatpush.msra.mxu0 %v338
    %429 = vmatpush.msra.mxu0 %v337
    %430 = vmatpush.msra.mxu0 %v336
    %431 = vmatpush.msra.mxu0 %v335
    %432 = vmatmul.f32.gmra.mxu0 %v288
    %v433 = vpop.f32.mrf.mxu0
    %v434 = vadd.f32 %v369, %v433
    %435 = vmatmul.f32.gmra.mxu0 %v290
    %v436 = vpop.f32.mrf.mxu0
    %v437 = vadd.f32 %v372, %v436
    %438 = vmatmul.f32.gmra.mxu0 %v292
    %v439 = vpop.f32.mrf.mxu0
    %v440 = vadd.f32 %v375, %v439
    %441 = vmatmul.f32.gmra.mxu0 %v294
    %v442 = vpop.f32.mrf.mxu0
    %v443 = vadd.f32 %v378, %v442
    %444 = vmatmul.f32.gmra.mxu0 %v296
    %v445 = vpop.f32.mrf.mxu0
    %v446 = vadd.f32 %v381, %v445
    %447 = vmatmul.f32.gmra.mxu0 %v298
    %v448 = vpop.f32.mrf.mxu0
    %v449 = vadd.f32 %v384, %v448
    %450 = vmatmul.f32.gmra.mxu0 %v300
    %v451 = vpop.f32.mrf.mxu0
    %v452 = vadd.f32 %v387, %v451
    %453 = vmatmul.f32.gmra.mxu0 %v302
    %v454 = vpop.f32.mrf.mxu0
    %v455 = vadd.f32 %v390, %v454
    %456 = vmatmul.f32.gmra.mxu0 %v304
    %v457 = vpop.f32.mrf.mxu0
    %v458 = vadd.f32 %v393, %v457
    %459 = vmatmul.f32.gmra.mxu0 %v306
    %v460 = vpop.f32.mrf.mxu0
    %v461 = vadd.f32 %v396, %v460
    %462 = vmatmul.f32.gmra.mxu0 %v308
    %v463 = vpop.f32.mrf.mxu0
    %v464 = vadd.f32 %v399, %v463
    %465 = vmatmul.f32.gmra.mxu0 %v310
    %v466 = vpop.f32.mrf.mxu0
    %v467 = vadd.f32 %v402, %v466
    %468 = vmatmul.f32.gmra.mxu0 %v312
    %v469 = vpop.f32.mrf.mxu0
    %v470 = vadd.f32 %v405, %v469
    %471 = vmatmul.f32.gmra.mxu0 %v314
    %v472 = vpop.f32.mrf.mxu0
    %v473 = vadd.f32 %v408, %v472
    %474 = vmatmul.f32.gmra.mxu0 %v316
    %v475 = vpop.f32.mrf.mxu0
    %v476 = vadd.f32 %v411, %v475
    %477 = vmatmul.f32.gmra.mxu0 %v318
    %v478 = vpop.f32.mrf.mxu0
    %v479 = vadd.f32 %v414, %v478
    %480 = vdwg.mxu0
    %v481 = vld [vmem:[%s4] sm:$0x1]
    %v483 = vperm.slane %v481, 0
    %485 = vmatpush.msra.mxu0 %v479
    %486 = vmatpush.msra.mxu0 %v476
    %487 = vmatpush.msra.mxu0 %v473
    %488 = vmatpush.msra.mxu0 %v470
    %489 = vmatpush.msra.mxu0 %v467
    %490 = vmatpush.msra.mxu0 %v464
    %491 = vmatpush.msra.mxu0 %v461
    %492 = vmatpush.msra.mxu0 %v458
    %493 = vmatpush.msra.mxu0 %v455
    %494 = vmatpush.msra.mxu0 %v452
    %495 = vmatpush.msra.mxu0 %v449
    %496 = vmatpush.msra.mxu0 %v446
    %497 = vmatpush.msra.mxu0 %v443
    %498 = vmatpush.msra.mxu0 %v440
    %499 = vmatpush.msra.mxu0 %v437
    %500 = vmatpush.msra.mxu0 %v434
    %501 = vmatmul.f32.gmra.mxu0 %v103
    %v502 = vpop.f32.mrf.mxu0
    %v503 = vadd.f32 %v483, %v502
    %504 = vmatmul.f32.gmra.mxu0 %v104
    %v505 = vpop.f32.mrf.mxu0
    %v506 = vadd.f32 %v483, %v505
    %507 = vmatmul.f32.gmra.mxu0 %v105
    %v508 = vpop.f32.mrf.mxu0
    %v509 = vadd.f32 %v483, %v508
    %510 = vmatmul.f32.gmra.mxu0 %v106
    %v511 = vpop.f32.mrf.mxu0
    %v512 = vadd.f32 %v483, %v511
    %513 = vmatmul.f32.gmra.mxu0 %v107
    %v514 = vpop.f32.mrf.mxu0
    %v515 = vadd.f32 %v483, %v514
    %516 = vmatmul.f32.gmra.mxu0 %v108
    %v517 = vpop.f32.mrf.mxu0
    %v518 = vadd.f32 %v483, %v517
    %519 = vmatmul.f32.gmra.mxu0 %v109
    %v520 = vpop.f32.mrf.mxu0
    %v521 = vadd.f32 %v483, %v520
    %522 = vmatmul.f32.gmra.mxu0 %v110
    %v523 = vpop.f32.mrf.mxu0
    %v524 = vadd.f32 %v483, %v523
    %525 = vmatmul.f32.gmra.mxu0 %v111
    %v526 = vpop.f32.mrf.mxu0
    %v527 = vadd.f32 %v483, %v526
    %528 = vmatmul.f32.gmra.mxu0 %v112
    %v529 = vpop.f32.mrf.mxu0
    %v530 = vadd.f32 %v483, %v529
    %531 = vmatmul.f32.gmra.mxu0 %v113
    %v532 = vpop.f32.mrf.mxu0
    %v533 = vadd.f32 %v483, %v532
    %534 = vmatmul.f32.gmra.mxu0 %v114
    %v535 = vpop.f32.mrf.mxu0
    %v536 = vadd.f32 %v483, %v535
    %537 = vmatmul.f32.gmra.mxu0 %v115
    %v538 = vpop.f32.mrf.mxu0
    %v539 = vadd.f32 %v483, %v538
    %540 = vmatmul.f32.gmra.mxu0 %v116
    %v541 = vpop.f32.mrf.mxu0
    %v542 = vadd.f32 %v483, %v541
    %543 = vmatmul.f32.gmra.mxu0 %v117
    %v544 = vpop.f32.mrf.mxu0
    %v545 = vadd.f32 %v483, %v544
    %546 = vmatmul.f32.gmra.mxu0 %v118
    %v547 = vpop.f32.mrf.mxu0
    %v548 = vadd.f32 %v483, %v547
    %549 = vdwg.mxu0
    %v550 = vld [vmem:[#allocation10] sm:$0xff]
    %v551 = vld [vmem:[#allocation10 + $0x8] sm:$0xff]
    %v552 = vld [vmem:[#allocation10 + $0x10] sm:$0xff]
    %v553 = vld [vmem:[#allocation10 + $0x18] sm:$0xff]
    %v554 = vld [vmem:[#allocation10 + $0x20] sm:$0xff]
    %v555 = vld [vmem:[#allocation10 + $0x28] sm:$0xff]
    %v556 = vld [vmem:[#allocation10 + $0x30] sm:$0xff]
    %v557 = vld [vmem:[#allocation10 + $0x38] sm:$0xff]
    %v558 = vld [vmem:[#allocation10 + $0x40] sm:$0xff]
    %v559 = vld [vmem:[#allocation10 + $0x48] sm:$0xff]
    %v560 = vld [vmem:[#allocation10 + $0x50] sm:$0xff]
    %v561 = vld [vmem:[#allocation10 + $0x58] sm:$0xff]
    %v562 = vld [vmem:[#allocation10 + $0x60] sm:$0xff]
    %v563 = vld [vmem:[#allocation10 + $0x68] sm:$0xff]
    %v564 = vld [vmem:[#allocation10 + $0x70] sm:$0xff]
    %v565 = vld [vmem:[#allocation10 + $0x78] sm:$0xff]
    %v566 = vld [vmem:[%s6] sm:$0x1]
    %v568 = vperm.slane %v566, 0
    %570 = vmatpush.msra.mxu0 %v565
    %571 = vmatpush.msra.mxu0 %v564
    %572 = vmatpush.msra.mxu0 %v563
    %573 = vmatpush.msra.mxu0 %v562
    %574 = vmatpush.msra.mxu0 %v561
    %575 = vmatpush.msra.mxu0 %v560
    %576 = vmatpush.msra.mxu0 %v559
    %577 = vmatpush.msra.mxu0 %v558
    %578 = vmatpush.msra.mxu0 %v557
    %579 = vmatpush.msra.mxu0 %v556
    %580 = vmatpush.msra.mxu0 %v555
    %581 = vmatpush.msra.mxu0 %v554
    %582 = vmatpush.msra.mxu0 %v553
    %583 = vmatpush.msra.mxu0 %v552
    %584 = vmatpush.msra.mxu0 %v551
    %585 = vmatpush.msra.mxu0 %v550
    %586 = vmatmul.f32.gmra.mxu0 %v503
    %v587 = vpop.f32.mrf.mxu0
    %v588 = vadd.f32 %v568, %v587
    %589 = vmatmul.f32.gmra.mxu0 %v506
    %v590 = vpop.f32.mrf.mxu0
    %v591 = vadd.f32 %v568, %v590
    %592 = vmatmul.f32.gmra.mxu0 %v509
    %v593 = vpop.f32.mrf.mxu0
    %v594 = vadd.f32 %v568, %v593
    %595 = vmatmul.f32.gmra.mxu0 %v512
    %v596 = vpop.f32.mrf.mxu0
    %v597 = vadd.f32 %v568, %v596
    %598 = vmatmul.f32.gmra.mxu0 %v515
    %v599 = vpop.f32.mrf.mxu0
    %v600 = vadd.f32 %v568, %v599
    %601 = vmatmul.f32.gmra.mxu0 %v518
    %v602 = vpop.f32.mrf.mxu0
    %v603 = vadd.f32 %v568, %v602
    %604 = vmatmul.f32.gmra.mxu0 %v521
    %v605 = vpop.f32.mrf.mxu0
    %v606 = vadd.f32 %v568, %v605
    %607 = vmatmul.f32.gmra.mxu0 %v524
    %v608 = vpop.f32.mrf.mxu0
    %v609 = vadd.f32 %v568, %v608
    %610 = vmatmul.f32.gmra.mxu0 %v527
    %v611 = vpop.f32.mrf.mxu0
    %v612 = vadd.f32 %v568, %v611
    %613 = vmatmul.f32.gmra.mxu0 %v530
    %v614 = vpop.f32.mrf.mxu0
    %v615 = vadd.f32 %v568, %v614
    %616 = vmatmul.f32.gmra.mxu0 %v533
    %v617 = vpop.f32.mrf.mxu0
    %v618 = vadd.f32 %v568, %v617
    %619 = vmatmul.f32.gmra.mxu0 %v536
    %v620 = vpop.f32.mrf.mxu0
    %v621 = vadd.f32 %v568, %v620
    %622 = vmatmul.f32.gmra.mxu0 %v539
    %v623 = vpop.f32.mrf.mxu0
    %v624 = vadd.f32 %v568, %v623
    %625 = vmatmul.f32.gmra.mxu0 %v542
    %v626 = vpop.f32.mrf.mxu0
    %v627 = vadd.f32 %v568, %v626
    %628 = vmatmul.f32.gmra.mxu0 %v545
    %v629 = vpop.f32.mrf.mxu0
    %v630 = vadd.f32 %v568, %v629
    %631 = vmatmul.f32.gmra.mxu0 %v548
    %v632 = vpop.f32.mrf.mxu0
    %v633 = vadd.f32 %v568, %v632
    %634 = vdwg.mxu0
    %635 = vmax.xlane.f32.xlu0 %v588
    %v636 = vpop.xlane.xlu0 %635
    %637 = vmax.xlane.f32.xlu0 %v591
    %v638 = vpop.xlane.xlu0 %637
    %639 = vmax.xlane.f32.xlu0 %v594
    %v640 = vpop.xlane.xlu0 %639
    %641 = vmax.xlane.f32.xlu0 %v597
    %v642 = vpop.xlane.xlu0 %641
    %643 = vmax.xlane.f32.xlu0 %v600
    %v644 = vpop.xlane.xlu0 %643
    %645 = vmax.xlane.f32.xlu0 %v603
    %v646 = vpop.xlane.xlu0 %645
    %647 = vmax.xlane.f32.xlu0 %v606
    %v648 = vpop.xlane.xlu0 %647
    %649 = vmax.xlane.f32.xlu0 %v609
    %v650 = vpop.xlane.xlu0 %649
    %651 = vmax.xlane.f32.xlu0 %v612
    %v652 = vpop.xlane.xlu0 %651
    %653 = vmax.xlane.f32.xlu0 %v615
    %v654 = vpop.xlane.xlu0 %653
    %655 = vmax.xlane.f32.xlu0 %v618
    %v656 = vpop.xlane.xlu0 %655
    %657 = vmax.xlane.f32.xlu0 %v621
    %v658 = vpop.xlane.xlu0 %657
    %659 = vmax.xlane.f32.xlu0 %v624
    %v660 = vpop.xlane.xlu0 %659
    %661 = vmax.xlane.f32.xlu0 %v627
    %v662 = vpop.xlane.xlu0 %661
    %663 = vmax.xlane.f32.xlu0 %v630
    %v664 = vpop.xlane.xlu0 %663
    %665 = vmax.xlane.f32.xlu0 %v633
    %v666 = vpop.xlane.xlu0 %665
    %v667 = vsub.f32 %v588, %v636
    %v668 = vsub.f32 %v591, %v638
    %v669 = vsub.f32 %v594, %v640
    %v670 = vsub.f32 %v597, %v642
    %v671 = vsub.f32 %v600, %v644
    %v672 = vsub.f32 %v603, %v646
    %v673 = vsub.f32 %v606, %v648
    %v674 = vsub.f32 %v609, %v650
    %v675 = vsub.f32 %v612, %v652
    %v676 = vsub.f32 %v615, %v654
    %v677 = vsub.f32 %v618, %v656
    %v678 = vsub.f32 %v621, %v658
    %v679 = vsub.f32 %v624, %v660
    %v680 = vsub.f32 %v627, %v662
    %v681 = vsub.f32 %v630, %v664
    %v682 = vsub.f32 %v633, %v666
    %v683 = vmul.f32 %v667, 1.442695
    %v684 = vpow.pop %v683
    %v685 = vmul.f32 %v668, 1.442695
    %v686 = vpow.pop %v685
    %v687 = vmul.f32 %v669, 1.442695
    %v688 = vpow.pop %v687
    %v689 = vmul.f32 %v670, 1.442695
    %v690 = vpow.pop %v689
    %v691 = vmul.f32 %v671, 1.442695
    %v692 = vpow.pop %v691
    %v693 = vmul.f32 %v672, 1.442695
    %v694 = vpow.pop %v693
    %v695 = vmul.f32 %v673, 1.442695
    %v696 = vpow.pop %v695
    %v697 = vmul.f32 %v674, 1.442695
    %v698 = vpow.pop %v697
    %v699 = vmul.f32 %v675, 1.442695
    %v700 = vpow.pop %v699
    %v701 = vmul.f32 %v676, 1.442695
    %v702 = vpow.pop %v701
    %v703 = vmul.f32 %v677, 1.442695
    %v704 = vpow.pop %v703
    %v705 = vmul.f32 %v678, 1.442695
    %v706 = vpow.pop %v705
    %v707 = vmul.f32 %v679, 1.442695
    %v708 = vpow.pop %v707
    %v709 = vmul.f32 %v680, 1.442695
    %v710 = vpow.pop %v709
    %v711 = vmul.f32 %v681, 1.442695
    %v712 = vpow.pop %v711
    %v713 = vmul.f32 %v682, 1.442695
    %v714 = vpow.pop %v713
    %715 = vadd.xlane.f32.xlu0 %v684
    %v716 = vpop.xlane.xlu0 %715
    %717 = vadd.xlane.f32.xlu0 %v686
    %v718 = vpop.xlane.xlu0 %717
    %719 = vadd.xlane.f32.xlu0 %v688
    %v720 = vpop.xlane.xlu0 %719
    %721 = vadd.xlane.f32.xlu0 %v690
    %v722 = vpop.xlane.xlu0 %721
    %723 = vadd.xlane.f32.xlu0 %v692
    %v724 = vpop.xlane.xlu0 %723
    %725 = vadd.xlane.f32.xlu0 %v694
    %v726 = vpop.xlane.xlu0 %725
    %727 = vadd.xlane.f32.xlu0 %v696
    %v728 = vpop.xlane.xlu0 %727
    %729 = vadd.xlane.f32.xlu0 %v698
    %v730 = vpop.xlane.xlu0 %729
    %731 = vadd.xlane.f32.xlu0 %v700
    %v732 = vpop.xlane.xlu0 %731
    %733 = vadd.xlane.f32.xlu0 %v702
    %v734 = vpop.xlane.xlu0 %733
    %735 = vadd.xlane.f32.xlu0 %v704
    %v736 = vpop.xlane.xlu0 %735
    %737 = vadd.xlane.f32.xlu0 %v706
    %v738 = vpop.xlane.xlu0 %737
    %739 = vadd.xlane.f32.xlu0 %v708
    %v740 = vpop.xlane.xlu0 %739
    %741 = vadd.xlane.f32.xlu0 %v710
    %v742 = vpop.xlane.xlu0 %741
    %743 = vadd.xlane.f32.xlu0 %v712
    %v744 = vpop.xlane.xlu0 %743
    %745 = vadd.xlane.f32.xlu0 %v714
    %v746 = vpop.xlane.xlu0 %745
    %v747 = vlog2.pop %v716
    %v748 = vmul.f32 %v747, 0.6931472
    %v749 = vlog2.pop %v718
    %v750 = vmul.f32 %v749, 0.6931472
    %v751 = vlog2.pop %v720
    %v752 = vmul.f32 %v751, 0.6931472
    %v753 = vlog2.pop %v722
    %v754 = vmul.f32 %v753, 0.6931472
    %v755 = vlog2.pop %v724
    %v756 = vmul.f32 %v755, 0.6931472
    %v757 = vlog2.pop %v726
    %v758 = vmul.f32 %v757, 0.6931472
    %v759 = vlog2.pop %v728
    %v760 = vmul.f32 %v759, 0.6931472
    %v761 = vlog2.pop %v730
    %v762 = vmul.f32 %v761, 0.6931472
    %v763 = vlog2.pop %v732
    %v764 = vmul.f32 %v763, 0.6931472
    %v765 = vlog2.pop %v734
    %v766 = vmul.f32 %v765, 0.6931472
    %v767 = vlog2.pop %v736
    %v768 = vmul.f32 %v767, 0.6931472
    %v769 = vlog2.pop %v738
    %v770 = vmul.f32 %v769, 0.6931472
    %v771 = vlog2.pop %v740
    %v772 = vmul.f32 %v771, 0.6931472
    %v773 = vlog2.pop %v742
    %v774 = vmul.f32 %v773, 0.6931472
    %v775 = vlog2.pop %v744
    %v776 = vmul.f32 %v775, 0.6931472
    %v777 = vlog2.pop %v746
    %v778 = vmul.f32 %v777, 0.6931472
    %v779 = vsub.f32 %v667, %v748
    %v780 = vsub.f32 %v668, %v750
    %v781 = vsub.f32 %v669, %v752
    %v782 = vsub.f32 %v670, %v754
    %v783 = vsub.f32 %v671, %v756
    %v784 = vsub.f32 %v672, %v758
    %v785 = vsub.f32 %v673, %v760
    %v786 = vsub.f32 %v674, %v762
    %v787 = vsub.f32 %v675, %v764
    %v788 = vsub.f32 %v676, %v766
    %v789 = vsub.f32 %v677, %v768
    %v790 = vsub.f32 %v678, %v770
    %v791 = vsub.f32 %v679, %v772
    %v792 = vsub.f32 %v680, %v774
    %v793 = vsub.f32 %v681, %v776
    %v794 = vsub.f32 %v682, %v778
    %795 = vst [vmem:[#allocation11] sm:$0xff] %v779
    %796 = vst [vmem:[#allocation11 + $0x8] sm:$0xff] %v780
    %797 = vst [vmem:[#allocation11 + $0x10] sm:$0xff] %v781
    %798 = vst [vmem:[#allocation11 + $0x18] sm:$0xff] %v782
    %799 = vst [vmem:[#allocation11 + $0x20] sm:$0xff] %v783
    %800 = vst [vmem:[#allocation11 + $0x28] sm:$0xff] %v784
    %801 = vst [vmem:[#allocation11 + $0x30] sm:$0xff] %v785
    %802 = vst [vmem:[#allocation11 + $0x38] sm:$0xff] %v786
    %803 = vst [vmem:[#allocation11 + $0x40] sm:$0xff] %v787
    %804 = vst [vmem:[#allocation11 + $0x48] sm:$0xff] %v788
    %805 = vst [vmem:[#allocation11 + $0x50] sm:$0xff] %v789
    %806 = vst [vmem:[#allocation11 + $0x58] sm:$0xff] %v790
    %807 = vst [vmem:[#allocation11 + $0x60] sm:$0xff] %v791
    %808 = vst [vmem:[#allocation11 + $0x68] sm:$0xff] %v792
    %809 = vst [vmem:[#allocation11 + $0x70] sm:$0xff] %v793
    %810 = vst [vmem:[#allocation11 + $0x78] sm:$0xff] %v794
    // Predicated region
    $region50: #{tpu_custom_call.1} parent=1 // pred_check
      _
    $region51: #{tpu_custom_call.1} parent=1 // pred_check_branch
      %812 = sbr.rel (0) target = $region53
    $region52: #{tpu_custom_call.1} parent=1 // pred_region
      %814 = vsyncadd [#allocation4], 0
      %s815 = sshll.u32 [#allocation11], 4
      %s816 = int_to_ptr.vmem [resolvable:$true] %s815
      %s817 = sshll.u32 %s7, 4
      %s818 = int_to_ptr.hbm [resolvable:$true] %s817
      %823 = dma.vmem_to_hbm [thread:$0]  %s816, 2048, %s818, [#allocation4], 128, 128, 8
    $region53: #{tpu_custom_call.1} parent=1 // pred_fallthru
      _
    // Predicated region
    $region54: #{tpu_custom_call.1} parent=1 // pred_check
      _
    $region55: #{tpu_custom_call.1} parent=1 // pred_check_branch
      %825 = sbr.rel (0) target = $region57
    $region56: #{tpu_custom_call.1} parent=1 // pred_region
      %827 = dma.done [#allocation4], 2048
    $region57: #{tpu_custom_call.1} parent=1 // pred_fallthru
      _
    %828 = vsyncpa [#allocation3], 1
    %829 = vsyncpa [#allocation6], 1
    %830 = vsyncpa [#allocation9], 1
    %831 = vsyncpa [#allocation4], 1

</llo_original>
